<compile_context>
chip_gen: v5e
topology: v5e:2x2
jax: 0.10.0
libtpu: 0.0.40
codegen_flags: <defaults>
</compile_context>

<pallas_src>
import math

import jax
import jax.numpy as jnp
from jax.experimental import pallas as pl
from jax.experimental.pallas import tpu as pltpu


_TARGET_ELEMS_PER_STEP = 1 << 20      # ~4 MiB of f32 output per grid step
_VMEM_BUDGET_BYTES = 10 << 20         # double-buffered footprint cap (v5e-safe)
_MAX_FUSED_SAMPLES = 8                # above this, fall back to an XLA stack


def _pick_tile_rows(rows, lane, n_inputs):
    """Rows per grid step on the [rows, lane] view (lane is a multiple of 128)."""
    # Per-step VMEM (double buffered): 2 * elems * (n_inputs * 1B u8 + 4B f32).
    cap_elems = max(1, _VMEM_BUDGET_BYTES // (2 * (n_inputs + 4)))
    elems = min(_TARGET_ELEMS_PER_STEP, cap_elems)
    tile_rows = max(32, (elems // lane) // 32 * 32)
    tile_rows = min(tile_rows, rows)
    # If the grid would have a single step on a non-trivial input, split into two
    # balanced steps so v7x's 2 TensorCores both get work under "parallel"
    # semantics.  On 1-TC chips this only adds one ~0.35 us step.
    if tile_rows >= rows and rows >= 64:
        tile_rows = min(rows, ((rows + 1) // 2 + 31) // 32 * 32)
    return tile_rows


def _pick_lane(total):
    """Largest lane width (multiple of 128, <= 1024) that divides `total`."""
    for lane in (1024, 512, 256, 128):
        if total % lane == 0:
            return lane
    return None


def _normalize_single(raw2d):
    """u8-valued [rows, lane] -> f32 [rows, lane] in [0, 1]; lane % 128 == 0."""
    rows, lane = raw2d.shape
    tile_rows = _pick_tile_rows(rows, lane, n_inputs=1)
    total = rows * lane

    def kernel(x_ref, o_ref):
        o_ref[...] = x_ref[...].astype(jnp.float32) / jnp.float32(255.0)

    return pl.pallas_call(
        kernel,
        out_shape=jax.ShapeDtypeStruct((rows, lane), jnp.float32),
        grid_spec=pl.GridSpec(
            grid=(pl.cdiv(rows, tile_rows),),
            in_specs=[pl.BlockSpec((tile_rows, lane), lambda i: (i, 0))],
            out_specs=pl.BlockSpec((tile_rows, lane), lambda i: (i, 0)),
        ),
        compiler_params=pltpu.CompilerParams(dimension_semantics=("parallel",)),
        cost_estimate=pl.CostEstimate(
            flops=total, transcendentals=0, bytes_accessed=5 * total),
    )(raw2d)


def _normalize_batched(samples2d, rows, lane):
    """Fused default_collate + normalize.

    samples2d: list of N u8-valued [rows, lane] arrays (same shape).
    Returns f32 [N, rows, lane] without ever materializing a stacked u8 batch.
    Grid = (sample, chunk); each sample's index_map only advances its block index
    on its own grid rows, so every input byte is DMA'd ~once.
    """
    n = len(samples2d)
    tile_rows = _pick_tile_rows(rows, lane, n_inputs=n)
    total = n * rows * lane

    def kernel(*refs):
        in_refs, out_ref = refs[:n], refs[n]
        sid = pl.program_id(0)
        x = in_refs[0][...]
        for i in range(1, n):
            x = jnp.where(sid == i, in_refs[i][...], x)
        out_ref[0] = x.astype(jnp.float32) / jnp.float32(255.0)

    in_specs = [
        pl.BlockSpec((tile_rows, lane),
                     lambda s, c, i=i: (jnp.where(s == i, c, 0), 0))
        for i in range(n)
    ]
    out_spec = pl.BlockSpec((1, tile_rows, lane), lambda s, c: (s, c, 0))

    return pl.pallas_call(
        kernel,
        out_shape=jax.ShapeDtypeStruct((n, rows, lane), jnp.float32),
        grid_spec=pl.GridSpec(
            grid=(n, pl.cdiv(rows, tile_rows)),
            in_specs=in_specs,
            out_specs=out_spec,
        ),
        compiler_params=pltpu.CompilerParams(
            dimension_semantics=("parallel", "parallel")),
        cost_estimate=pl.CostEstimate(
            flops=total, transcendentals=0, bytes_accessed=5 * total),
    )(*samples2d)


def serve_input_processor(samples):
    """Emulates _ServeInputProcessor.forward.

    samples: a single array [C, H, W] or a list of arrays [C, H, W]
             (raw, uint8-valued) -- mirrors `sample` / `[sample]` in the module.
    Returns: collated float32 batch [N, C, H, W] normalized to [0, 1].
    """
    # `if not isinstance(sample, list): sample = [sample]`
    if not isinstance(samples, (list, tuple)):
        samples = [samples]
    samples = [jnp.asarray(s) for s in samples]

    shape = samples[0].shape
    for s in samples:
        if s.shape != shape:
            raise ValueError("default_collate requires equal sample shapes")
    n = len(samples)
    per = math.prod(shape)
    lane = _pick_lane(per)

    if lane is None:
        # TODO(synk): per-sample size not a multiple of 128; handled by a single
        # fused XLA convert pass (~5-7 B/elem) instead of a masked-store Pallas
        # tail kernel.  Not hit for standard CHW image shapes.
        raw = samples[0][None] if n == 1 else jnp.stack(samples, axis=0)
        return raw.astype(jnp.float32) / 255.0

    rows = per // lane
    if n == 1:
        # Single-sample serving path: no collate copy at all.
        out2d = _normalize_single(samples[0].reshape(rows, lane))
        return out2d.reshape((1,) + shape)

    if n <= _MAX_FUSED_SAMPLES:
        # Fused collate + normalize: no u8 stack round trip.
        out3d = _normalize_batched(
            [s.reshape(rows, lane) for s in samples], rows, lane)
        return out3d.reshape((n,) + shape)

    # TODO(synk): very large sample lists fall back to an XLA stack (one extra
    # u8 HBM round trip) before the single flattened kernel.
    raw2d = jnp.stack(samples, axis=0).reshape(n * rows, lane)
    return _normalize_single(raw2d).reshape((n,) + shape)


def _reference(samples):
    if not isinstance(samples, (list, tuple)):
        samples = [samples]
    raw = jnp.stack([jnp.asarray(s) for s in samples], axis=0).astype(jnp.float32)
    return raw / 255.0


if __name__ == "__main__":
    key = jax.random.PRNGKey(0)
    C, H, W = 4, 16, 16
    n_samples = 2

    keys = jax.random.split(key, n_samples)
    # Raw "serve" inputs: uint8-valued images, one per incoming request sample.
    samples = [
        jax.random.randint(k, (C, H, W), 0, 256, dtype=jnp.int32).astype(jnp.uint8)
        for k in keys
    ]

    out = jax.block_until_ready(serve_input_processor(samples))
    ref = _reference(samples)
    assert out.shape == (n_samples, C, H, W), out.shape
    assert out.dtype == jnp.float32, out.dtype
    assert jnp.allclose(out, ref, atol=1e-6), "mismatch vs reference"

    # Also exercise the single-sample (no-collate) serving path.
    out1 = jax.block_until_ready(serve_input_processor(samples[0]))
    assert out1.shape == (1, C, H, W), out1.shape
    assert jnp.allclose(out1, _reference(samples[0]), atol=1e-6), "single-sample mismatch"

    # TODO(synk): the real module's serve_input/collate_fn are arbitrary user
    # callables; only the canonical decode-normalize + default_collate path is
    # implemented here.
    print("KERNEL_OK")
</pallas_src>

<mosaic_0001>
module attributes {stable_mosaic.version = 11 : i64} {
  func.func @kernel(%arg0: i32, %arg1: i32, %arg2: memref<1x1024xi8, #tpu.memory_space<vmem>>, %arg3: memref<1x1024xi8, #tpu.memory_space<vmem>>, %arg4: memref<1x1x1024xf32, #tpu.memory_space<vmem>>) attributes {dimension_semantics = [#tpu.dimension_semantics<parallel>, #tpu.dimension_semantics<parallel>], iteration_bounds = array<i64: 2, 1>, scalar_prefetch = 0 : i64, scratch_operands = 0 : i64, tpu.core_type = #tpu.core_type<tc>, window_params = [{transform_indices = @transform_0, window_bounds = array<i64: 1, 1024>}, {transform_indices = @transform_1, window_bounds = array<i64: 1, 1024>}, {transform_indices = @transform_2, window_bounds = array<i64: 1, 1, 1024>}]} {
    %c0 = arith.constant 0 : index
    %c0_0 = arith.constant 0 : index
    %0 = vector.load %arg2[%c0, %c0_0] : memref<1x1024xi8, #tpu.memory_space<vmem>>, vector<1x1024xi8>
    %c1_i32 = arith.constant 1 : i32
    %1 = arith.cmpi eq, %arg0, %c1_i32 : i32
    %c0_1 = arith.constant 0 : index
    %c0_2 = arith.constant 0 : index
    %2 = vector.load %arg3[%c0_1, %c0_2] : memref<1x1024xi8, #tpu.memory_space<vmem>>, vector<1x1024xi8>
    %3 = arith.select %1, %2, %0 : vector<1x1024xi8>
    %4 = arith.uitofp %3 : vector<1x1024xi8> to vector<1x1024xf32>
    %cst = arith.constant 2.550000e+02 : f32
    %5 = vector.broadcast %cst : f32 to vector<1x1024xf32>
    %6 = arith.divf %4, %5 : vector<1x1024xf32>
    %c0_3 = arith.constant 0 : index
    %c0_4 = arith.constant 0 : index
    %c0_5 = arith.constant 0 : index
    %7 = vector.load %arg4[%c0_3, %c0_4, %c0_5] : memref<1x1x1024xf32, #tpu.memory_space<vmem>>, vector<1x1x1024xf32>
    %8 = vector.shape_cast %7 : vector<1x1x1024xf32> to vector<1x1024xf32>
    %9 = vector.shape_cast %6 : vector<1x1024xf32> to vector<1x1x1024xf32>
    tpu.vector_store %arg4[%c0_3, %c0_4, %c0_5], %9 {strides = array<i32>} : memref<1x1x1024xf32, #tpu.memory_space<vmem>>, vector<1x1x1024xf32>,
    return
  }
  func.func @transform_0(%arg0: i32, %arg1: i32) -> (i32, i32) {
    %c0_i32 = arith.constant 0 : i32
    %0 = arith.cmpi eq, %arg0, %c0_i32 : i32
    %c0_i32_0 = arith.constant 0 : i32
    %1 = arith.select %0, %arg1, %c0_i32_0 : i32
    %c0_i32_1 = arith.constant 0 : i32
    %c0_i32_2 = arith.constant 0 : i32
    return %1, %c0_i32_1 : i32, i32
  }
  func.func @transform_1(%arg0: i32, %arg1: i32) -> (i32, i32) {
    %c1_i32 = arith.constant 1 : i32
    %0 = arith.cmpi eq, %arg0, %c1_i32 : i32
    %c0_i32 = arith.constant 0 : i32
    %1 = arith.select %0, %arg1, %c0_i32 : i32
    %c0_i32_0 = arith.constant 0 : i32
    %c0_i32_1 = arith.constant 0 : i32
    return %1, %c0_i32_0 : i32, i32
  }
  func.func @transform_2(%arg0: i32, %arg1: i32) -> (i32, i32, i32) {
    %c0_i32 = arith.constant 0 : i32
    %c0_i32_0 = arith.constant 0 : i32
    return %arg0, %arg1, %c0_i32 : i32, i32, i32
  }
}

</mosaic_0001>

<llo_original>
// kernel: tpu_custom_call.1
$region0: #{tpu_custom_call.1}
  #allocation0 [shape = 'u32[]', space=smem, size = 0x4, offset = 0x4, fixed_abs, tag = 'smem constant byte address 0x4 - core index']
  #allocation1 [shape = 'u32[72,128]{1,0:T(1,128)}', space=vmem, size = 0x9000, scoped, tag = 'internal scratch']
  %s0 = inlined_call_operand.hbm [shape: u8[1,1024], index: 0, kind: input, shape index: {}]
  %s1 = inlined_call_operand.hbm [shape: u8[1,1024], index: 1, kind: input, shape index: {}]
  %s2 = inlined_call_operand.hbm [shape: f32[2,1,1024], index: 2, kind: output, shape index: {}]
  %s3 = sld [smem:[#allocation0]]
  $region49: #{tpu_custom_call.1} parent=0
    _
  %s5 = ssub.s32 1, %s3
  %s6 = scalar_select 0, %s5, %s3
  $region1: #{tpu_custom_call.1} parent=0
    #allocation2 [shape = 'u8[8192]{0}', space=vmem, size = 0x2000, scoped, tag = 'input window, operand 0']
    #allocation3 [shape = 's32[2]{0}', space=sflag, size = 0x8, scoped, tag = 'scoped memory for tpu_custom_call.1']
    #allocation4 [shape = 's32[2]{0}', space=sflag, size = 0x8, scoped, tag = 'scoped memory for tpu_custom_call.1']
    #allocation5 [shape = 'u8[8192]{0}', space=vmem, size = 0x2000, scoped, tag = 'input window, operand 1']
    #allocation6 [shape = 's32[2]{0}', space=sflag, size = 0x8, scoped, tag = 'scoped memory for tpu_custom_call.1']
    #allocation7 [shape = 'u8[8192]{0}', space=vmem, size = 0x2000, scoped, tag = 'output window, operand 0']
    %7 = vsyncpa [#allocation3], 0
    %s8 = scalar_lea.sflag [#allocation3], 1
    %9 = vsyncpa %s8, 0
    %10 = vsyncpa [#allocation6], 0
    %s11 = scalar_lea.sflag [#allocation6], 1
    %12 = vsyncpa %s11, 0
    %13 = vsyncpa [#allocation4], 0
    %s14 = scalar_lea.sflag [#allocation4], 1
    %15 = vsyncpa %s14, 0
    loop: start=0, step=1, limit=4
    $region2: #{tpu_custom_call.1} parent=1 // loop_pre_header
      _
    $region3: #{tpu_custom_call.1} parent=1 // loop_header
      %s17 = sphi 0, %s21
      %p18 = scmp.ge.s32.totalorder %s17, 4
      %s24 = sphi 0, %s36
      %s25 = sphi 0, %s32
      %s26 = sphi 0, %s24
      %s27 = sphi 0, %s25
      %s28 = sphi 0, %s26
      %s29 = sphi 0, %s27
      %s43 = sphi 0, %s45
      %s46 = sphi 0, %s43
      %s47 = sphi 0, %s46
      %s63 = sphi 0, %s47
      %s73 = sphi 0, %s75
      %s76 = sphi 0, %s73
      %s77 = sphi 0, %s76
      %s93 = sphi 0, %s77
      %s101 = sphi 0, %s103
      %s104 = sphi 0, %s101
      %s105 = sphi 0, %s104
      %s121 = sphi 0, %s105
    $region4: #{tpu_custom_call.1} parent=1 // loop_header_branch
      %20 = sbr.rel (%p18) target = $region8
    $region5: #{tpu_custom_call.1} parent=1 // loop_body
      %s22 = ssub.s32 %s17, 1
      %s23 = ssub.s32 %s17, 2
      %s30 = sadd.s32 1, %s25
      %p31 = scmp.ge.s32.totalorder %s30, 1
      %s32 = scalar_select %p31, 0, %s30
      %s33 = sadd.s32 1, %s24
      %s34 = scalar_select %p31, %s33, %s24
      %p35 = scmp.ge.s32.totalorder %s34, 2
      %s36 = scalar_select %p35, 0, %s34
      %p37 = scmp.eq.s32.totalorder %s24, 0
      %s38 = scalar_select %p37, %s25, 0
      %p39 = scmp.eq.s32.totalorder %s36, 0
      %s40 = scalar_select %p39, %s32, 0
      %s41 = ssub.s32 %s38, %s40
      %p42 = scmp.eq.s32.totalorder %s41, 0
      %s44 = sadd.s32 %s43, 1
      %s45 = scalar_select %p42, %s43, %s44
      %p48 = pneg %p42
      %p49 = scmp.eq.s32.totalorder %s17, 1
      %p50 = por %p48, %p49
      %p51 = scmp.ne.s32.totalorder %s43, %s46
      %p52 = scmp.eq.s32.totalorder %s17, 0
      %p53 = por %p51, %p52
      %p54 = scmp.ne.s32.totalorder %s43, %s46
      %p55 = scmp.eq.s32.totalorder %s22, 1
      %p56 = por %p54, %p55
      %p57 = scmp.ne.s32.totalorder %s46, %s47
      %p58 = scmp.eq.s32.totalorder %s22, 0
      %p59 = por %p57, %p58
      %p60 = scmp.ne.s32.totalorder %s46, %s47
      %p61 = scmp.eq.s32.totalorder %s23, 1
      %p62 = por %p60, %p61
      %p64 = scmp.ne.s32.totalorder %s47, %s63
      %p65 = scmp.eq.s32.totalorder %s23, 0
      %p66 = por %p64, %p65
      %p67 = scmp.eq.s32.totalorder %s24, 1
      %s68 = scalar_select %p67, %s25, 0
      %p69 = scmp.eq.s32.totalorder %s36, 1
      %s70 = scalar_select %p69, %s32, 0
      %s71 = ssub.s32 %s68, %s70
      %p72 = scmp.eq.s32.totalorder %s71, 0
      %s74 = sadd.s32 %s73, 1
      %s75 = scalar_select %p72, %s73, %s74
      %p78 = pneg %p72
      %p79 = scmp.eq.s32.totalorder %s17, 1
      %p80 = por %p78, %p79
      %p81 = scmp.ne.s32.totalorder %s73, %s76
      %p82 = scmp.eq.s32.totalorder %s17, 0
      %p83 = por %p81, %p82
      %p84 = scmp.ne.s32.totalorder %s73, %s76
      %p85 = scmp.eq.s32.totalorder %s22, 1
      %p86 = por %p84, %p85
      %p87 = scmp.ne.s32.totalorder %s76, %s77
      %p88 = scmp.eq.s32.totalorder %s22, 0
      %p89 = por %p87, %p88
      %p90 = scmp.ne.s32.totalorder %s76, %s77
      %p91 = scmp.eq.s32.totalorder %s23, 1
      %p92 = por %p90, %p91
      %p94 = scmp.ne.s32.totalorder %s77, %s93
      %p95 = scmp.eq.s32.totalorder %s23, 0
      %p96 = por %p94, %p95
      %s97 = ssub.s32 %s24, %s36
      %s98 = ssub.s32 %s25, %s32
      %s99 = sor.u32 %s97, %s98
      %p100 = scmp.eq.s32.totalorder %s99, 0
      %s102 = sadd.s32 %s101, 1
      %s103 = scalar_select %p100, %s101, %s102
      %p106 = pneg %p100
      %p107 = scmp.eq.s32.totalorder %s17, 1
      %p108 = por %p106, %p107
      %p109 = scmp.ne.s32.totalorder %s101, %s104
      %p110 = scmp.eq.s32.totalorder %s17, 0
      %p111 = por %p109, %p110
      %p112 = scmp.ne.s32.totalorder %s101, %s104
      %p113 = scmp.eq.s32.totalorder %s22, 1
      %p114 = por %p112, %p113
      %p115 = scmp.ne.s32.totalorder %s104, %s105
      %p116 = scmp.eq.s32.totalorder %s22, 0
      %p117 = por %p115, %p116
      %p118 = scmp.ne.s32.totalorder %s104, %s105
      %p119 = scmp.eq.s32.totalorder %s23, 1
      %p120 = por %p118, %p119
      %p122 = scmp.ne.s32.totalorder %s105, %s121
      %p123 = scmp.eq.s32.totalorder %s23, 0
      %p124 = por %p122, %p123
      %p125 = scmp.le.s32.totalorder 1, %s17
      %p126 = scmp.lt.s32.totalorder %s17, 3
      %p127 = pnand %p125, %p126
      %p128 = pneg %p127
      // Predicated region
      $region9: #{tpu_custom_call.1} parent=5 // pred_check
        _
      $region10: #{tpu_custom_call.1} parent=5 // pred_check_branch
        %130 = sbr.rel (%p127) target = $region12
      $region11: #{tpu_custom_call.1} parent=5 // pred_region
        %s131 = ssub.s32 %s17, 1
      $region12: #{tpu_custom_call.1} parent=5 // pred_fallthru
        _
      %p132 = scmp.lt.s32.totalorder %s17, 2
      // Predicated region
      $region13: #{tpu_custom_call.1} parent=5 // pred_check
        %p133 = pneg %p132
      $region14: #{tpu_custom_call.1} parent=5 // pred_check_branch
        %135 = sbr.rel (%p133) target = $region16
      $region15: #{tpu_custom_call.1} parent=5 // pred_region
        // Predicated region
        $region17: #{tpu_custom_call.1} parent=15 // pred_check
          %p136 = pneg %p53
        $region18: #{tpu_custom_call.1} parent=15 // pred_check_branch
          %138 = sbr.rel (%p136) target = $region20
        $region19: #{tpu_custom_call.1} parent=15 // pred_region
          %s139 = sand.u32 %s43, 1
          %s140 = scalar_lea.sflag [#allocation3], %s139
          %s141 = sand.u32 %s43, 1
          %s142 = smul.addr %s141, 8
          %s143 = scalar_lea.vmem [#allocation2], %s142
          %p144 = scmp.eq.s32.totalorder %s24, 0
          %s145 = scalar_select %p144, %s25, 0
          %147 = vsyncadd %s140, 0
          %s148 = smul.addr %s145, 8
          %s149 = scalar_lea.hbm %s0, %s148
          %s151 = sshll.u32 %s149, 4
          %s152 = int_to_ptr.hbm [resolvable:$true] %s151
          %s153 = sshll.u32 %s143, 4
          %s154 = int_to_ptr.vmem [resolvable:$true] %s153
          %156 = dma.hbm_to_vmem [thread:$0]  %s152, 128, %s154, %s140
        $region20: #{tpu_custom_call.1} parent=15 // pred_fallthru
          _
        // Predicated region
        $region21: #{tpu_custom_call.1} parent=15 // pred_check
          %p157 = pneg %p83
        $region22: #{tpu_custom_call.1} parent=15 // pred_check_branch
          %159 = sbr.rel (%p157) target = $region24
        $region23: #{tpu_custom_call.1} parent=15 // pred_region
          %s160 = sand.u32 %s73, 1
          %s161 = scalar_lea.sflag [#allocation6], %s160
          %s162 = sand.u32 %s73, 1
          %s163 = smul.addr %s162, 8
          %s164 = scalar_lea.vmem [#allocation5], %s163
          %p165 = scmp.eq.s32.totalorder %s24, 1
          %s166 = scalar_select %p165, %s25, 0
          %168 = vsyncadd %s161, 0
          %s169 = smul.addr %s166, 8
          %s170 = scalar_lea.hbm %s1, %s169
          %s172 = sshll.u32 %s170, 4
          %s173 = int_to_ptr.hbm [resolvable:$true] %s172
          %s174 = sshll.u32 %s164, 4
          %s175 = int_to_ptr.vmem [resolvable:$true] %s174
          %177 = dma.hbm_to_vmem [thread:$0]  %s173, 128, %s175, %s161
        $region24: #{tpu_custom_call.1} parent=15 // pred_fallthru
          _
      $region16: #{tpu_custom_call.1} parent=5 // pred_fallthru
        _
      %p178 = scmp.le.s32.totalorder 1, %s17
      %p179 = scmp.lt.s32.totalorder %s17, 3
      %p180 = pnand %p178, %p179
      %p181 = pneg %p180
      // Predicated region
      $region25: #{tpu_custom_call.1} parent=5 // pred_check
        _
      $region26: #{tpu_custom_call.1} parent=5 // pred_check_branch
        %183 = sbr.rel (%p180) target = $region28
      $region27: #{tpu_custom_call.1} parent=5 // pred_region
        %s184 = ssub.s32 %s17, 1
        %s185 = sand.u32 %s46, 1
        %s186 = scalar_lea.sflag [#allocation3], %s185
        %s187 = sand.u32 %s46, 1
        %s188 = smul.addr %s187, 8
        %s189 = scalar_lea.vmem [#allocation2], %s188
        // Predicated region
        $region29: #{tpu_custom_call.1} parent=27 // pred_check
          %p190 = pneg %p59
        $region30: #{tpu_custom_call.1} parent=27 // pred_check_branch
          %192 = sbr.rel (%p190) target = $region32
        $region31: #{tpu_custom_call.1} parent=27 // pred_region
          %194 = dma.done %s186, 128
        $region32: #{tpu_custom_call.1} parent=27 // pred_fallthru
          _
        %s195 = sand.u32 %s76, 1
        %s196 = scalar_lea.sflag [#allocation6], %s195
        %s197 = sand.u32 %s76, 1
        %s198 = smul.addr %s197, 8
        %s199 = scalar_lea.vmem [#allocation5], %s198
        // Predicated region
        $region33: #{tpu_custom_call.1} parent=27 // pred_check
          %p200 = pneg %p89
        $region34: #{tpu_custom_call.1} parent=27 // pred_check_branch
          %202 = sbr.rel (%p200) target = $region36
        $region35: #{tpu_custom_call.1} parent=27 // pred_region
          %204 = dma.done %s196, 128
        $region36: #{tpu_custom_call.1} parent=27 // pred_fallthru
          _
        %s205 = sand.u32 %s46, 1
        %s206 = scalar_lea.sflag [#allocation3], %s205
        %s207 = sand.u32 %s46, 1
        %s208 = smul.addr %s207, 8
        %s209 = scalar_lea.vmem [#allocation2], %s208
        %p210 = pneg %p59
        %p211 = pneg %p56
        %s212 = sand.u32 %s76, 1
        %s213 = scalar_lea.sflag [#allocation6], %s212
        %s214 = sand.u32 %s76, 1
        %s215 = smul.addr %s214, 8
        %s216 = scalar_lea.vmem [#allocation5], %s215
        %p217 = pneg %p89
        %p218 = pneg %p86
        %p219 = pneg %p117
        %p220 = pneg %p114
        %s221 = sand.u32 %s104, 1
        %s222 = scalar_lea.sflag [#allocation4], %s221
        %s223 = sand.u32 %s104, 1
        %s224 = smul.addr %s223, 8
        %s225 = scalar_lea.vmem [#allocation7], %s224
        %p226 = scmp.eq.s32.totalorder %s26, 0
        %s227 = scalar_select %p226, %s27, 0
        %p228 = scmp.eq.s32.totalorder %s26, 1
        %s229 = scalar_select %p228, %s27, 0
        %v230 = vld [vmem:[%s189] sm:$0xff]
        %p231 = scmp.eq.s32.totalorder %s26, 1
        %v232 = vld [vmem:[%s199] sm:$0xff]
        %s233 = scalar_select %p231, 1, 0
        %v234 = vstv %s233
        %vm235 = vcmp.eq.s32.totalorder %v234, 1
        %v236 = vsel %vm235, 1, 0
        %v237 = vpack.c.b16 %v236, %v236
        %v238 = vpack.c.b8 %v237, %v237
        %vm239 = vnez %v238
        %v240 = vsel %vm239, %v232, %v230
        %v241 = vunpack.c.0.s8 %v240
        %v242 = vunpack.c.1.s8 %v240
        %v243 = vunpack.c.2.s8 %v240
        %v244 = vunpack.c.3.s8 %v240
        %v245 = vand.u32 %v241, 255
        %v246 = vand.u32 %v242, 255
        %v247 = vand.u32 %v243, 255
        %v248 = vand.u32 %v244, 255
        %v249 = vcvt.s32.f32 %v245
        %v250 = vcvt.s32.f32 %v246
        %v251 = vcvt.s32.f32 %v247
        %v252 = vcvt.s32.f32 %v248
        %v253 = vrcp.pop 255.0
        %v254 = vmul.f32 255.0, %v253
        %v255 = vsub.f32 1.0, %v254
        %v256 = vmul.f32 %v253, %v255
        %v257 = vadd.f32 %v253, %v256
        %vm258 = vweird.f32 %v253
        %v259 = vsel %vm258, %v253, %v257
        %v260 = vmul.f32 %v249, %v259
        %v261 = vmul.f32 %v250, %v259
        %v262 = vmul.f32 %v251, %v259
        %v263 = vmul.f32 %v252, %v259
        %v268 = vrot.slane %v260, 3
        %v269 = vrot.slane %v261, 6
        %v270 = vrot.slane %v261, 1
        %v271 = vrot.slane %v262, 4
        %v272 = vrot.slane %v262, 7
        %v273 = vrot.slane %v263, 2
        %v274 = vrot.slane %v263, 5
        %vm275 = vcmask 1040384
        %v276 = vsel %vm275, %v260, %v268
        %vm277 = vcmask 1042434
        %v278 = vsel %vm277, %v269, %v270
        %vm279 = vcmask 1041408
        %v280 = vsel %vm279, %v276, %v278
        %vm281 = vcmask 1044484
        %v282 = vsel %vm281, %v271, %v272
        %vm283 = vcmask 1046534
        %v284 = vsel %vm283, %v273, %v274
        %vm285 = vcmask 1045508
        %v286 = vsel %vm285, %v282, %v284
        %vm287 = vcmask 1043456
        %v288 = vsel %vm287, %v280, %v286
        %290 = vst [vmem:[%s225] sm:$0xff] %v288
        %s291 = sand.u32 %s104, 1
        %s292 = scalar_lea.sflag [#allocation4], %s291
        %s293 = sand.u32 %s104, 1
        %s294 = smul.addr %s293, 8
        %s295 = scalar_lea.vmem [#allocation7], %s294
        // Predicated region
        $region37: #{tpu_custom_call.1} parent=27 // pred_check
          %p296 = pneg %p114
        $region38: #{tpu_custom_call.1} parent=27 // pred_check_branch
          %298 = sbr.rel (%p296) target = $region40
        $region39: #{tpu_custom_call.1} parent=27 // pred_region
          %300 = vsyncadd %s292, 0
          %s301 = smul.addr %s27, 8
          %s302 = smul.addr %s26, 8
          %s303 = sadd.s32 %s301, %s302
          %s304 = scalar_lea.hbm %s2, %s303
          %s306 = sshll.u32 %s295, 4
          %s307 = int_to_ptr.vmem [resolvable:$true] %s306
          %s308 = sshll.u32 %s304, 4
          %s309 = int_to_ptr.hbm [resolvable:$true] %s308
          %311 = dma.vmem_to_hbm [thread:$0]  %s307, 128, %s309, %s292
        $region40: #{tpu_custom_call.1} parent=27 // pred_fallthru
          _
      $region28: #{tpu_custom_call.1} parent=5 // pred_fallthru
        _
      %p312 = scmp.le.s32.totalorder 2, %s17
      // Predicated region
      $region41: #{tpu_custom_call.1} parent=5 // pred_check
        %p313 = pneg %p312
      $region42: #{tpu_custom_call.1} parent=5 // pred_check_branch
        %315 = sbr.rel (%p313) target = $region44
      $region43: #{tpu_custom_call.1} parent=5 // pred_region
        %s316 = ssub.s32 %s17, 2
        // Predicated region
        $region45: #{tpu_custom_call.1} parent=43 // pred_check
          %p317 = pneg %p120
        $region46: #{tpu_custom_call.1} parent=43 // pred_check_branch
          %319 = sbr.rel (%p317) target = $region48
        $region47: #{tpu_custom_call.1} parent=43 // pred_region
          %s320 = sand.u32 %s105, 1
          %s321 = scalar_lea.sflag [#allocation4], %s320
          %s322 = sand.u32 %s105, 1
          %s323 = smul.addr %s322, 8
          %s324 = scalar_lea.vmem [#allocation7], %s323
          %326 = dma.done %s321, 128
        $region48: #{tpu_custom_call.1} parent=43 // pred_fallthru
          _
      $region44: #{tpu_custom_call.1} parent=5 // pred_fallthru
        _
    $region6: #{tpu_custom_call.1} parent=1 // loop_footer
      %s21 = sadd.s32 1, %s17
    $region7: #{tpu_custom_call.1} parent=1 // loop_footer_branch
      %16 = sbr.rel target = $region3
    $region8: #{tpu_custom_call.1} parent=1 // loop_exit
      _
    %327 = vsyncpa [#allocation3], 1
    %s328 = scalar_lea.sflag [#allocation3], 1
    %329 = vsyncpa %s328, 1
    %330 = vsyncpa [#allocation6], 1
    %s331 = scalar_lea.sflag [#allocation6], 1
    %332 = vsyncpa %s331, 1
    %333 = vsyncpa [#allocation4], 1
    %s334 = scalar_lea.sflag [#allocation4], 1
    %335 = vsyncpa %s334, 1

</llo_original>
